<compile_context>
chip_gen: v7x
topology: tpu7x:2x2x1
jax: 0.10.0
libtpu: 0.0.40
codegen_flags: <defaults>
</compile_context>

<pallas_src>
import jax
import jax.numpy as jnp
from jax.experimental import pallas as pl
from jax.experimental.pallas import tpu as pltpu


def _round_up(x: int, m: int) -> int:
    return ((x + m - 1) // m) * m


def _choose_batch_tile(B: int, block_b: int) -> int:
    """Batch tile: >=8 sublanes, multiple of 16 for larger B, >=2 grid steps if possible."""
    if B <= 16:
        return _round_up(B, 8)                       # tiny batch: a single small tile
    tb = min(block_b, _round_up(B, 16))
    tb = max(16, (tb // 16) * 16)                    # bf16 packs 16 sublanes / vreg
    if _round_up(B, tb) // tb < 2:                   # give v7x's 2 TensorCores work
        tb = max(16, _round_up((B + 1) // 2, 16))
    return tb


def classifier_kernel(s_ref, x_ref, w1_ref, b1_ref, w2_ref, b2_ref, o_ref):
    # s_ref : SMEM (2,) f32   -- [g1/||V1||_F, g2/||V2||_F]
    # x_ref : (TB, Dp) f32    -- batch tile (cast to bf16 in-kernel, hides under MXU)
    # w1_ref: (Dp, Hp) bf16   -- V1^T, VMEM-resident (single-buffered) across grid steps
    # b1_ref: (1, Hp)  f32
    # w2_ref: (Hp, Op) bf16   -- V2^T, VMEM-resident (single-buffered)
    # b2_ref: (1, Op)  f32
    # o_ref : (TB, Op)        -- f32 (default) or bf16
    s1 = s_ref[0]
    s2 = s_ref[1]

    x_bf16 = x_ref[...].astype(jnp.bfloat16)
    h = jnp.dot(x_bf16, w1_ref[...], preferred_element_type=jnp.float32)
    h = jnp.maximum(s1 * h + b1_ref[...], 0.0)       # weight-norm scale + bias + ReLU in f32
    # TODO(synk): nn.Dropout(p>0) in training mode would need pltpu.prng_* masking;
    #             default p=0 / eval mode is the identity, which is what we implement.
    out = jnp.dot(h.astype(jnp.bfloat16), w2_ref[...], preferred_element_type=jnp.float32)
    o_ref[...] = (s2 * out + b2_ref[...]).astype(o_ref.dtype)


def prepare_classifier_params(v1, g1, b1, v2, g2, b2, *, lane_multiple: int = 128):
    """One-time (init-path) parameter prep: weight-norm scales + transposed/padded/bf16 weights.

    On v6e/v7x with wide hidden layers, lane_multiple=256 better fills the 256x256 MXU;
    128 is correct everywhere and matches v5e's 128x128 MXUs.
    """
    H, D_in = v1.shape
    O = v2.shape[0]
    Dp = _round_up(D_in, lane_multiple)
    Hp = _round_up(H, lane_multiple)
    Op = _round_up(O, lane_multiple)

    # Weight-norm scalars (tiny Frobenius reductions) ride into the kernel via SMEM
    # scalar prefetch; no scaled weight copy is ever written to HBM.
    s1 = (g1 / jnp.sqrt(jnp.sum(v1.astype(jnp.float32) ** 2))).astype(jnp.float32)
    s2 = (g2 / jnp.sqrt(jnp.sum(v2.astype(jnp.float32) ** 2))).astype(jnp.float32)
    scales = jnp.stack([s1, s2])

    w1_t = jnp.zeros((Dp, Hp), jnp.bfloat16).at[:D_in, :H].set(v1.T.astype(jnp.bfloat16))
    w2_t = jnp.zeros((Hp, Op), jnp.bfloat16).at[:H, :O].set(v2.T.astype(jnp.bfloat16))
    b1p = jnp.zeros((1, Hp), jnp.float32).at[0, :H].set(b1.astype(jnp.float32))
    b2p = jnp.zeros((1, Op), jnp.float32).at[0, :O].set(b2.astype(jnp.float32))
    return {"scales": scales, "w1_t": w1_t, "b1p": b1p, "w2_t": w2_t, "b2p": b2p,
            "dims": (D_in, H, O)}


def classifier_forward(x, params, *, block_b: int = 512, out_dtype=None):
    """Forward pass of the weight-normed classifier head via a Pallas TPU kernel.

    x: [B, D_in] f32. `params` comes from prepare_classifier_params (init-time prep).
    """
    B, D_in = x.shape
    pD_in, H, O = params["dims"]
    assert D_in == pD_in, (D_in, pD_in)
    w1_t, b1p, w2_t, b2p = params["w1_t"], params["b1p"], params["w2_t"], params["b2p"]
    scales = params["scales"]
    Dp, Hp = w1_t.shape
    Op = w2_t.shape[1]
    out_dtype = x.dtype if out_dtype is None else out_dtype

    TB = _choose_batch_tile(B, block_b)
    Bp = _round_up(B, TB)
    nb = Bp // TB

    # Pad x only if needed (no separate bf16 pass over HBM -- the cast is in-kernel).
    if (Bp, Dp) != (B, D_in):
        xp = jnp.zeros((Bp, Dp), x.dtype).at[:B, :D_in].set(x)
    else:
        xp = x

    # Explicit VMEM budget: double-buffered x/out tiles, single-buffered resident
    # weights/biases, plus in-kernel temporaries. ~50% headroom, floor 16 MiB, cap 128 MiB.
    x_bytes = jnp.dtype(x.dtype).itemsize
    o_bytes = jnp.dtype(out_dtype).itemsize
    vmem_bytes = (
        2 * TB * Dp * x_bytes            # x tiles (double-buffered)
        + Dp * Hp * 2 + Hp * Op * 2      # W1^T, W2^T bf16 (single-buffered, resident)
        + 8 * Hp * 4 + 8 * Op * 4        # biases (sublane-padded)
        + 2 * TB * Op * o_bytes          # output tiles (double-buffered)
        + TB * Dp * 2 + TB * Hp * 4      # in-kernel bf16(x) and f32 hidden temporaries
    )
    vmem_limit = int(min(max(vmem_bytes * 1.5 + (2 << 20), 16 << 20), 128 << 20))

    flops = 2 * Bp * (Dp * Hp + Hp * Op)
    bytes_accessed = (xp.size * x_bytes + w1_t.size * 2 + w2_t.size * 2
                      + b1p.size * 4 + b2p.size * 4 + Bp * Op * o_bytes)

    resident = pl.Buffered(1)            # constant index_map => no second pipeline buffer

    out_padded = pl.pallas_call(
        classifier_kernel,
        out_shape=jax.ShapeDtypeStruct((Bp, Op), out_dtype),
        grid_spec=pltpu.PrefetchScalarGridSpec(
            num_scalar_prefetch=1,                 # the (2,) weight-norm scale vector
            grid=(nb,),
            in_specs=[
                pl.BlockSpec((TB, Dp), lambda i, s: (i, 0)),                          # x
                pl.BlockSpec((Dp, Hp), lambda i, s: (0, 0), pipeline_mode=resident),  # W1^T
                pl.BlockSpec((1, Hp),  lambda i, s: (0, 0), pipeline_mode=resident),  # b1
                pl.BlockSpec((Hp, Op), lambda i, s: (0, 0), pipeline_mode=resident),  # W2^T
                pl.BlockSpec((1, Op),  lambda i, s: (0, 0), pipeline_mode=resident),  # b2
            ],
            out_specs=pl.BlockSpec((TB, Op), lambda i, s: (i, 0)),
        ),
        compiler_params=pltpu.CompilerParams(
            dimension_semantics=("parallel",),     # batch tiles are independent
            vmem_limit_bytes=vmem_limit,
        ),
        cost_estimate=pl.CostEstimate(
            flops=flops, transcendentals=0, bytes_accessed=bytes_accessed),
    )(scales, xp, w1_t, b1p, w2_t, b2p)

    return out_padded[:B, :O]


def reference_forward_f32(x, v1, g1, b1, v2, g2, b2):
    """Pure-JAX f32 reference matching the PyTorch module semantics."""
    w1_eff = g1 * v1 / jnp.sqrt(jnp.sum(v1 * v1))
    w2_eff = g2 * v2 / jnp.sqrt(jnp.sum(v2 * v2))
    h = jnp.maximum(x @ w1_eff.T + b1, 0.0)
    return h @ w2_eff.T + b2


def reference_forward_bf16(x, v1, g1, b1, v2, g2, b2):
    """Reference with the same bf16-operand / f32-accumulate precision as the kernel."""
    s1 = g1 / jnp.sqrt(jnp.sum(v1 * v1))
    s2 = g2 / jnp.sqrt(jnp.sum(v2 * v2))
    h = s1 * jnp.dot(x.astype(jnp.bfloat16), v1.T.astype(jnp.bfloat16),
                     preferred_element_type=jnp.float32) + b1
    h = jnp.maximum(h, 0.0)
    out = s2 * jnp.dot(h.astype(jnp.bfloat16), v2.T.astype(jnp.bfloat16),
                       preferred_element_type=jnp.float32) + b2
    return out


if __name__ == "__main__":
    # Small shapes consistent with the module: Linear(in, hid) -> ReLU -> Linear(hid, out)
    B, D_IN, HID, OUT = 8, 32, 64, 16

    key = jax.random.PRNGKey(0)
    k_x, k_v1, k_b1, k_v2, k_b2 = jax.random.split(key, 5)

    x = jax.random.normal(k_x, (B, D_IN), dtype=jnp.float32)

    # nn.Linear-style deterministic init for the underlying weight_norm "v" params.
    bound1 = 1.0 / (D_IN ** 0.5)
    v1 = jax.random.uniform(k_v1, (HID, D_IN), minval=-bound1, maxval=bound1, dtype=jnp.float32)
    b1 = jax.random.uniform(k_b1, (HID,), minval=-bound1, maxval=bound1, dtype=jnp.float32)
    bound2 = 1.0 / (HID ** 0.5)
    v2 = jax.random.uniform(k_v2, (OUT, HID), minval=-bound2, maxval=bound2, dtype=jnp.float32)
    b2 = jax.random.uniform(k_b2, (OUT,), minval=-bound2, maxval=bound2, dtype=jnp.float32)

    # weight_norm initializes g = ||v|| (dim=None -> scalar Frobenius norm)
    g1 = jnp.sqrt(jnp.sum(v1 * v1))
    g2 = jnp.sqrt(jnp.sum(v2 * v2))

    # Init-time parameter prep (done once, outside the per-call path).
    params = prepare_classifier_params(v1, g1, b1, v2, g2, b2)

    out = classifier_forward(x, params)
    jax.block_until_ready(out)
    assert out.shape == (B, OUT), out.shape

    # Exact-precision check vs a reference using the same bf16/f32-acc arithmetic.
    ref_bf16 = reference_forward_bf16(x, v1, g1, b1, v2, g2, b2)
    assert jnp.allclose(out, ref_bf16, atol=1e-4, rtol=1e-4), "mismatch vs bf16 reference"

    # Loose sanity check vs the full-f32 PyTorch-semantics reference.
    ref_f32 = reference_forward_f32(x, v1, g1, b1, v2, g2, b2)
    assert jnp.allclose(out, ref_f32, atol=5e-2, rtol=5e-2), "mismatch vs f32 reference"

    print("KERNEL_OK")
</pallas_src>

<mosaic_0001>
module attributes {stable_mosaic.version = 11 : i64} {
  func.func @classifier_kernel(%arg0: i32, %arg1: memref<2xf32, #tpu.memory_space<smem>>, %arg2: memref<8x128xf32, #tpu.memory_space<vmem>>, %arg3: memref<128x128xbf16, #tpu.memory_space<vmem>>, %arg4: memref<1x128xf32, #tpu.memory_space<vmem>>, %arg5: memref<128x128xbf16, #tpu.memory_space<vmem>>, %arg6: memref<1x128xf32, #tpu.memory_space<vmem>>, %arg7: memref<8x128xf32, #tpu.memory_space<vmem>>) attributes {dimension_semantics = [#tpu.dimension_semantics<parallel>], iteration_bounds = array<i64: 1>, scalar_prefetch = 1 : i64, scratch_operands = 0 : i64, tpu.core_type = #tpu.core_type<tc>, window_params = [{transform_indices = @transform_0, window_bounds = array<i64: 8, 128>}, {pipeline_mode = #tpu.pipeline_mode<synchronous>, transform_indices = @transform_1, window_bounds = array<i64: 128, 128>}, {pipeline_mode = #tpu.pipeline_mode<synchronous>, transform_indices = @transform_2, window_bounds = array<i64: 1, 128>}, {pipeline_mode = #tpu.pipeline_mode<synchronous>, transform_indices = @transform_3, window_bounds = array<i64: 128, 128>}, {pipeline_mode = #tpu.pipeline_mode<synchronous>, transform_indices = @transform_4, window_bounds = array<i64: 1, 128>}, {transform_indices = @transform_5, window_bounds = array<i64: 8, 128>}]} {
    %c0 = arith.constant 0 : index
    %0 = memref.load %arg1[%c0] : memref<2xf32, #tpu.memory_space<smem>>
    %c1 = arith.constant 1 : index
    %1 = memref.load %arg1[%c1] : memref<2xf32, #tpu.memory_space<smem>>
    %c0_0 = arith.constant 0 : index
    %c0_1 = arith.constant 0 : index
    %2 = vector.load %arg2[%c0_0, %c0_1] : memref<8x128xf32, #tpu.memory_space<vmem>>, vector<8x128xf32>
    %3 = arith.truncf %2 : vector<8x128xf32> to vector<8x128xbf16>
    %c0_2 = arith.constant 0 : index
    %c0_3 = arith.constant 0 : index
    %4 = vector.load %arg3[%c0_2, %c0_3] : memref<128x128xbf16, #tpu.memory_space<vmem>>, vector<128x128xbf16>
    %cst = arith.constant dense<0.000000e+00> : vector<8x128xf32>
    %5 = tpu.matmul %3, %4, %cst {dimension_numbers = #tpu.dot_dimension_numbers<[1], [0], [0], [1], [0, 0, 1, 1], [], []>} : vector<8x128xbf16>, vector<128x128xbf16>, vector<8x128xf32> -> vector<8x128xf32>
    %6 = vector.broadcast %0 : f32 to vector<8x128xf32>
    %7 = arith.mulf %6, %5 : vector<8x128xf32>
    %c0_4 = arith.constant 0 : index
    %c0_5 = arith.constant 0 : index
    %8 = vector.load %arg4[%c0_4, %c0_5] : memref<1x128xf32, #tpu.memory_space<vmem>>, vector<1x128xf32>
    %9 = vector.broadcast %8 : vector<1x128xf32> to vector<8x128xf32>
    %10 = arith.addf %7, %9 : vector<8x128xf32>
    %cst_6 = arith.constant 0.000000e+00 : f32
    %11 = vector.broadcast %cst_6 : f32 to vector<8x128xf32>
    %12 = arith.maximumf %10, %11 : vector<8x128xf32>
    %13 = arith.truncf %12 : vector<8x128xf32> to vector<8x128xbf16>
    %c0_7 = arith.constant 0 : index
    %c0_8 = arith.constant 0 : index
    %14 = vector.load %arg5[%c0_7, %c0_8] : memref<128x128xbf16, #tpu.memory_space<vmem>>, vector<128x128xbf16>
    %cst_9 = arith.constant dense<0.000000e+00> : vector<8x128xf32>
    %15 = tpu.matmul %13, %14, %cst_9 {dimension_numbers = #tpu.dot_dimension_numbers<[1], [0], [0], [1], [0, 0, 1, 1], [], []>} : vector<8x128xbf16>, vector<128x128xbf16>, vector<8x128xf32> -> vector<8x128xf32>
    %16 = vector.broadcast %1 : f32 to vector<8x128xf32>
    %17 = arith.mulf %16, %15 : vector<8x128xf32>
    %c0_10 = arith.constant 0 : index
    %c0_11 = arith.constant 0 : index
    %18 = vector.load %arg6[%c0_10, %c0_11] : memref<1x128xf32, #tpu.memory_space<vmem>>, vector<1x128xf32>
    %19 = vector.broadcast %18 : vector<1x128xf32> to vector<8x128xf32>
    %20 = arith.addf %17, %19 : vector<8x128xf32>
    %c0_12 = arith.constant 0 : index
    %c0_13 = arith.constant 0 : index
    %21 = vector.load %arg7[%c0_12, %c0_13] : memref<8x128xf32, #tpu.memory_space<vmem>>, vector<8x128xf32>
    tpu.vector_store %arg7[%c0_12, %c0_13], %20 {strides = array<i32>} : memref<8x128xf32, #tpu.memory_space<vmem>>, vector<8x128xf32>,
    return
  }
  func.func @transform_0(%arg0: i32, %arg1: memref<2xf32, #tpu.memory_space<smem>>) -> (i32, i32) {
    %c0_i32 = arith.constant 0 : i32
    %c0_i32_0 = arith.constant 0 : i32
    return %arg0, %c0_i32 : i32, i32
  }
  func.func @transform_1(%arg0: i32, %arg1: memref<2xf32, #tpu.memory_space<smem>>) -> (i32, i32) {
    %c0_i32 = arith.constant 0 : i32
    %c0_i32_0 = arith.constant 0 : i32
    %c0_i32_1 = arith.constant 0 : i32
    return %c0_i32, %c0_i32_0 : i32, i32
  }
  func.func @transform_2(%arg0: i32, %arg1: memref<2xf32, #tpu.memory_space<smem>>) -> (i32, i32) {
    %c0_i32 = arith.constant 0 : i32
    %c0_i32_0 = arith.constant 0 : i32
    %c0_i32_1 = arith.constant 0 : i32
    return %c0_i32, %c0_i32_0 : i32, i32
  }
  func.func @transform_3(%arg0: i32, %arg1: memref<2xf32, #tpu.memory_space<smem>>) -> (i32, i32) {
    %c0_i32 = arith.constant 0 : i32
    %c0_i32_0 = arith.constant 0 : i32
    %c0_i32_1 = arith.constant 0 : i32
    return %c0_i32, %c0_i32_0 : i32, i32
  }
  func.func @transform_4(%arg0: i32, %arg1: memref<2xf32, #tpu.memory_space<smem>>) -> (i32, i32) {
    %c0_i32 = arith.constant 0 : i32
    %c0_i32_0 = arith.constant 0 : i32
    %c0_i32_1 = arith.constant 0 : i32
    return %c0_i32, %c0_i32_0 : i32, i32
  }
  func.func @transform_5(%arg0: i32, %arg1: memref<2xf32, #tpu.memory_space<smem>>) -> (i32, i32) {
    %c0_i32 = arith.constant 0 : i32
    %c0_i32_0 = arith.constant 0 : i32
    return %arg0, %c0_i32 : i32, i32
  }
}

</mosaic_0001>

<llo_original>
// kernel: tpu_custom_call.1
$region0: #{tpu_custom_call.1}
  #allocation0 [shape = 'u32[]', space=smem, size = 0x4, offset = 0x4, fixed_abs, tag = 'smem constant byte address 0x4 - core index']
  #allocation1 [shape = 'u32[144,128]{1,0:T(1,128)}', space=vmem, size = 0x12000, scoped, tag = 'internal scratch']
  #allocation2 [shape = 's32[1]{0}', space=sflag, size = 0x4, scoped, tag = 'scoped memory for tpu_custom_call.1']
  #allocation3 [shape = 'u8[512]{0}', space=smem, size = 0x200, scoped, tag = 'prefetched SMEM operand 0']
  %s0 = inlined_call_operand.hbm [shape: f32[2], index: 0, kind: input, shape index: {}]
  %s1 = inlined_call_operand.hbm [shape: f32[8,128], index: 1, kind: input, shape index: {}]
  %s2 = inlined_call_operand.hbm [shape: bf16[128,128], index: 2, kind: input, shape index: {}]
  %s3 = inlined_call_operand.vmem [shape: f32[1,128], index: 3, kind: input, shape index: {}]
  %s4 = inlined_call_operand.hbm [shape: bf16[128,128], index: 4, kind: input, shape index: {}]
  %s5 = inlined_call_operand.vmem [shape: f32[1,128], index: 5, kind: input, shape index: {}]
  %s6 = inlined_call_operand.hbm [shape: f32[8,128], index: 6, kind: output, shape index: {}]
  %s7 = sld [smem:[#allocation0]]
  $region42: #{tpu_custom_call.1} parent=0
    _
  %s9 = ssub.s32 1, %s7
  %s10 = scalar_select 0, %s9, %s7
  %12 = dma.hbm_to_smem %s0, 16, [#allocation3], [#allocation2]
  %13 = dma.done [#allocation2], 16
  %14 = sfence
  $region1: #{tpu_custom_call.1} parent=0
    #allocation4 [shape = 'u8[4096]{0}', space=vmem, size = 0x1000, scoped, tag = 'input window, operand 1, single buffered']
    #allocation5 [shape = 's32[1]{0}', space=sflag, size = 0x4, scoped, tag = 'scoped memory for tpu_custom_call.1']
    #allocation6 [shape = 's32[1]{0}', space=sflag, size = 0x4, scoped, tag = 'scoped memory for tpu_custom_call.1']
    #allocation7 [shape = 'u8[32768]{0}', space=vmem, size = 0x8000, scoped, tag = 'input window, operand 2, single buffered']
    #allocation8 [shape = 's32[1]{0}', space=sflag, size = 0x4, scoped, tag = 'scoped memory for tpu_custom_call.1']
    #allocation9 [shape = 'u8[32768]{0}', space=vmem, size = 0x8000, scoped, tag = 'input window, operand 4, single buffered']
    #allocation10 [shape = 'u8[4096]{0}', space=vmem, size = 0x1000, scoped, tag = 'output window, operand 0, single buffered']
    %15 = vsyncpa [#allocation5], 0
    %16 = vsyncpa [#allocation8], 0
    %17 = vsyncpa [#allocation6], 0
    // Predicated region
    $region2: #{tpu_custom_call.1} parent=1 // pred_check
      _
    $region3: #{tpu_custom_call.1} parent=1 // pred_check_branch
      %19 = sbr.rel (0) target = $region5
    $region4: #{tpu_custom_call.1} parent=1 // pred_region
      %s21 = ssub.s32 128, 128
      %22 = vsyncadd [#allocation5], %s21
      %s24 = sshll.u32 [#allocation4], 4
      %s25 = int_to_ptr.vmem [resolvable:$true] %s24
      %27 = dma.hbm_to_vmem [thread:$0]  %s1, 128, %s25, [#allocation5]
    $region5: #{tpu_custom_call.1} parent=1 // pred_fallthru
      _
    // Predicated region
    $region6: #{tpu_custom_call.1} parent=1 // pred_check
      _
    $region7: #{tpu_custom_call.1} parent=1 // pred_check_branch
      %29 = sbr.rel (0) target = $region9
    $region8: #{tpu_custom_call.1} parent=1 // pred_region
      %s31 = ssub.s32 1024, 1024
      %32 = vsyncadd [#allocation8], %s31
      %s33 = sshll.u32 [#allocation7], 4
      %s34 = int_to_ptr.vmem [resolvable:$true] %s33
      %39 = dma.hbm_to_vmem [thread:$0]  %s2, 1024, %s34, [#allocation8], 64, 64, 4
    $region9: #{tpu_custom_call.1} parent=1 // pred_fallthru
      _
    // Predicated region
    $region10: #{tpu_custom_call.1} parent=1 // pred_check
      _
    $region11: #{tpu_custom_call.1} parent=1 // pred_check_branch
      %41 = sbr.rel (0) target = $region13
    $region12: #{tpu_custom_call.1} parent=1 // pred_region
      _
    $region13: #{tpu_custom_call.1} parent=1 // pred_fallthru
      _
    // Predicated region
    $region14: #{tpu_custom_call.1} parent=1 // pred_check
      _
    $region15: #{tpu_custom_call.1} parent=1 // pred_check_branch
      %43 = sbr.rel (0) target = $region17
    $region16: #{tpu_custom_call.1} parent=1 // pred_region
      %s45 = ssub.s32 1024, 1024
      %46 = vsyncadd [#allocation8], %s45
      %s47 = sshll.u32 [#allocation9], 4
      %s48 = int_to_ptr.vmem [resolvable:$true] %s47
      %53 = dma.hbm_to_vmem [thread:$0]  %s4, 1024, %s48, [#allocation8], 64, 64, 4
    $region17: #{tpu_custom_call.1} parent=1 // pred_fallthru
      _
    // Predicated region
    $region18: #{tpu_custom_call.1} parent=1 // pred_check
      _
    $region19: #{tpu_custom_call.1} parent=1 // pred_check_branch
      %55 = sbr.rel (0) target = $region21
    $region20: #{tpu_custom_call.1} parent=1 // pred_region
      _
    $region21: #{tpu_custom_call.1} parent=1 // pred_fallthru
      _
    // Predicated region
    $region22: #{tpu_custom_call.1} parent=1 // pred_check
      _
    $region23: #{tpu_custom_call.1} parent=1 // pred_check_branch
      %57 = sbr.rel (0) target = $region25
    $region24: #{tpu_custom_call.1} parent=1 // pred_region
      %58 = dma.done [#allocation5], 128
    $region25: #{tpu_custom_call.1} parent=1 // pred_fallthru
      _
    // Predicated region
    $region26: #{tpu_custom_call.1} parent=1 // pred_check
      _
    $region27: #{tpu_custom_call.1} parent=1 // pred_check_branch
      %60 = sbr.rel (0) target = $region29
    $region28: #{tpu_custom_call.1} parent=1 // pred_region
      %61 = dma.done [#allocation8], 1024
    $region29: #{tpu_custom_call.1} parent=1 // pred_fallthru
      _
    // Predicated region
    $region30: #{tpu_custom_call.1} parent=1 // pred_check
      _
    $region31: #{tpu_custom_call.1} parent=1 // pred_check_branch
      %63 = sbr.rel (0) target = $region33
    $region32: #{tpu_custom_call.1} parent=1 // pred_region
      %64 = dma.done [#allocation8], 1024
    $region33: #{tpu_custom_call.1} parent=1 // pred_fallthru
      _
    %s66 = sld [smem:[#allocation3]]
    %s67 = sld [smem:[#allocation3 + $0x1]]
    %v68 = vld [vmem:[#allocation4] sm:$0xff]
    %v69 = vpack.c.bf16 %v68, %v68
    %v70 = vld [vmem:[#allocation7] sm:$0xf]
    %v71 = vld [vmem:[#allocation7 + $0x4] sm:$0xf]
    %v72 = vld [vmem:[#allocation7 + $0x8] sm:$0xf]
    %v73 = vld [vmem:[#allocation7 + $0xc] sm:$0xf]
    %v74 = vld [vmem:[#allocation7 + $0x10] sm:$0xf]
    %v75 = vld [vmem:[#allocation7 + $0x14] sm:$0xf]
    %v76 = vld [vmem:[#allocation7 + $0x18] sm:$0xf]
    %v77 = vld [vmem:[#allocation7 + $0x1c] sm:$0xf]
    %v78 = vld [vmem:[#allocation7 + $0x20] sm:$0xf]
    %v79 = vld [vmem:[#allocation7 + $0x24] sm:$0xf]
    %v80 = vld [vmem:[#allocation7 + $0x28] sm:$0xf]
    %v81 = vld [vmem:[#allocation7 + $0x2c] sm:$0xf]
    %v82 = vld [vmem:[#allocation7 + $0x30] sm:$0xf]
    %v83 = vld [vmem:[#allocation7 + $0x34] sm:$0xf]
    %v84 = vld [vmem:[#allocation7 + $0x38] sm:$0xf]
    %v85 = vld [vmem:[#allocation7 + $0x3c] sm:$0xf]
    %v102 = vunpack.c.l.b16 %v70
    %v103 = vunpack.c.l.b16 %v71
    %v104 = vunpack.c.l.b16 %v72
    %v105 = vunpack.c.l.b16 %v73
    %v106 = vunpack.c.l.b16 %v74
    %v107 = vunpack.c.l.b16 %v75
    %v108 = vunpack.c.l.b16 %v76
    %v109 = vunpack.c.l.b16 %v77
    %v110 = vunpack.c.l.b16 %v78
    %v111 = vunpack.c.l.b16 %v79
    %v112 = vunpack.c.l.b16 %v80
    %v113 = vunpack.c.l.b16 %v81
    %v114 = vunpack.c.l.b16 %v82
    %v115 = vunpack.c.l.b16 %v83
    %v116 = vunpack.c.l.b16 %v84
    %v117 = vunpack.c.l.b16 %v85
    %v118 = vpack.c.b16 %v103, %v102
    %v119 = vpack.c.b16 %v105, %v104
    %v120 = vpack.c.b16 %v107, %v106
    %v121 = vpack.c.b16 %v109, %v108
    %v122 = vpack.c.b16 %v111, %v110
    %v123 = vpack.c.b16 %v113, %v112
    %v124 = vpack.c.b16 %v115, %v114
    %v125 = vpack.c.b16 %v117, %v116
    %134 = vmatprep.subr.bf16.mxu0 0
    %135 = vmatpush1.bf16.msra.mxu0 %v118
    %136 = vmatprep.subr.bf16.mxu0 0
    %137 = vmatpush1.bf16.msra.mxu0 %v119
    %138 = vmatprep.subr.bf16.mxu0 0
    %139 = vmatpush1.bf16.msra.mxu0 %v120
    %140 = vmatprep.subr.bf16.mxu0 0
    %141 = vmatpush1.bf16.msra.mxu0 %v121
    %142 = vmatprep.subr.bf16.mxu0 0
    %143 = vmatpush1.bf16.msra.mxu0 %v122
    %144 = vmatprep.subr.bf16.mxu0 0
    %145 = vmatpush1.bf16.msra.mxu0 %v123
    %146 = vmatprep.subr.bf16.mxu0 0
    %147 = vmatpush1.bf16.msra.mxu0 %v124
    %148 = vmatprep.subr.bf16.mxu0 0
    %149 = vmatpush1.bf16.msra.mxu0 %v125
    %150 = vmatprep.subr.bf16.mxu0 0
    %151 = vmatpush1.bf16.msra.mxu0 0
    %152 = vmatprep.subr.bf16.mxu0 0
    %153 = vmatpush1.bf16.msra.mxu0 0
    %154 = vmatprep.subr.bf16.mxu0 0
    %155 = vmatpush1.bf16.msra.mxu0 0
    %156 = vmatprep.subr.bf16.mxu0 0
    %157 = vmatpush1.bf16.msra.mxu0 0
    %158 = vmatprep.subr.bf16.mxu0 0
    %159 = vmatpush1.bf16.msra.mxu0 0
    %160 = vmatprep.subr.bf16.mxu0 0
    %161 = vmatpush1.bf16.msra.mxu0 0
    %162 = vmatprep.subr.bf16.mxu0 0
    %163 = vmatpush1.bf16.msra.mxu0 0
    %164 = vmatprep.subr.bf16.mxu0 0
    %165 = vmatpush1.bf16.msra.mxu0 0
    %166 = vmatprep.mubr.bf16.mxu0 0
    %167 = vmatmul.mubr.bf16.gmra.mrb[0].mxu0 %v69
    %v168 = vpop.f32.mrb[0].mxu0
    %v169 = vadd.f32 0.0, %v168
    %v170 = vpop.f32.mrb[0].mxu0
    %v171 = vpop.f32.mrb[0].mxu0
    %v172 = vpop.f32.mrb[0].mxu0
    %173 = vdwg.mxu0
    %v174 = vstv %s66
    %v175 = vmul.f32 %v174, %v169
    %v176 = vld [vmem:[%s3] sm:$0x1]
    %v178 = vlaneseq
    %v179 = vshrl.u32 %v178, 7
    %v180 = vsub.s32 0, %v179
    %v181 = vrot.slane %v176, %v180
    %v183 = vadd.f32 %v175, %v181
    %v184 = vmax.f32 %v183, 0.0
    %v185 = vpack.c.bf16 %v184, %v184
    %v186 = vld [vmem:[#allocation9] sm:$0xf]
    %v187 = vld [vmem:[#allocation9 + $0x4] sm:$0xf]
    %v188 = vld [vmem:[#allocation9 + $0x8] sm:$0xf]
    %v189 = vld [vmem:[#allocation9 + $0xc] sm:$0xf]
    %v190 = vld [vmem:[#allocation9 + $0x10] sm:$0xf]
    %v191 = vld [vmem:[#allocation9 + $0x14] sm:$0xf]
    %v192 = vld [vmem:[#allocation9 + $0x18] sm:$0xf]
    %v193 = vld [vmem:[#allocation9 + $0x1c] sm:$0xf]
    %v194 = vld [vmem:[#allocation9 + $0x20] sm:$0xf]
    %v195 = vld [vmem:[#allocation9 + $0x24] sm:$0xf]
    %v196 = vld [vmem:[#allocation9 + $0x28] sm:$0xf]
    %v197 = vld [vmem:[#allocation9 + $0x2c] sm:$0xf]
    %v198 = vld [vmem:[#allocation9 + $0x30] sm:$0xf]
    %v199 = vld [vmem:[#allocation9 + $0x34] sm:$0xf]
    %v200 = vld [vmem:[#allocation9 + $0x38] sm:$0xf]
    %v201 = vld [vmem:[#allocation9 + $0x3c] sm:$0xf]
    %v218 = vunpack.c.l.b16 %v186
    %v219 = vunpack.c.l.b16 %v187
    %v220 = vunpack.c.l.b16 %v188
    %v221 = vunpack.c.l.b16 %v189
    %v222 = vunpack.c.l.b16 %v190
    %v223 = vunpack.c.l.b16 %v191
    %v224 = vunpack.c.l.b16 %v192
    %v225 = vunpack.c.l.b16 %v193
    %v226 = vunpack.c.l.b16 %v194
    %v227 = vunpack.c.l.b16 %v195
    %v228 = vunpack.c.l.b16 %v196
    %v229 = vunpack.c.l.b16 %v197
    %v230 = vunpack.c.l.b16 %v198
    %v231 = vunpack.c.l.b16 %v199
    %v232 = vunpack.c.l.b16 %v200
    %v233 = vunpack.c.l.b16 %v201
    %v234 = vpack.c.b16 %v219, %v218
    %v235 = vpack.c.b16 %v221, %v220
    %v236 = vpack.c.b16 %v223, %v222
    %v237 = vpack.c.b16 %v225, %v224
    %v238 = vpack.c.b16 %v227, %v226
    %v239 = vpack.c.b16 %v229, %v228
    %v240 = vpack.c.b16 %v231, %v230
    %v241 = vpack.c.b16 %v233, %v232
    %250 = vmatprep.subr.bf16.mxu0 0
    %251 = vmatpush1.bf16.msra.mxu0 %v234
    %252 = vmatprep.subr.bf16.mxu0 0
    %253 = vmatpush1.bf16.msra.mxu0 %v235
    %254 = vmatprep.subr.bf16.mxu0 0
    %255 = vmatpush1.bf16.msra.mxu0 %v236
    %256 = vmatprep.subr.bf16.mxu0 0
    %257 = vmatpush1.bf16.msra.mxu0 %v237
    %258 = vmatprep.subr.bf16.mxu0 0
    %259 = vmatpush1.bf16.msra.mxu0 %v238
    %260 = vmatprep.subr.bf16.mxu0 0
    %261 = vmatpush1.bf16.msra.mxu0 %v239
    %262 = vmatprep.subr.bf16.mxu0 0
    %263 = vmatpush1.bf16.msra.mxu0 %v240
    %264 = vmatprep.subr.bf16.mxu0 0
    %265 = vmatpush1.bf16.msra.mxu0 %v241
    %266 = vmatprep.subr.bf16.mxu0 0
    %267 = vmatpush1.bf16.msra.mxu0 0
    %268 = vmatprep.subr.bf16.mxu0 0
    %269 = vmatpush1.bf16.msra.mxu0 0
    %270 = vmatprep.subr.bf16.mxu0 0
    %271 = vmatpush1.bf16.msra.mxu0 0
    %272 = vmatprep.subr.bf16.mxu0 0
    %273 = vmatpush1.bf16.msra.mxu0 0
    %274 = vmatprep.subr.bf16.mxu0 0
    %275 = vmatpush1.bf16.msra.mxu0 0
    %276 = vmatprep.subr.bf16.mxu0 0
    %277 = vmatpush1.bf16.msra.mxu0 0
    %278 = vmatprep.subr.bf16.mxu0 0
    %279 = vmatpush1.bf16.msra.mxu0 0
    %280 = vmatprep.subr.bf16.mxu0 0
    %281 = vmatpush1.bf16.msra.mxu0 0
    %282 = vmatprep.mubr.bf16.mxu0 0
    %283 = vmatmul.mubr.bf16.gmra.mrb[0].mxu0 %v185
    %v284 = vpop.f32.mrb[0].mxu0
    %v285 = vadd.f32 0.0, %v284
    %v286 = vpop.f32.mrb[0].mxu0
    %v287 = vpop.f32.mrb[0].mxu0
    %v288 = vpop.f32.mrb[0].mxu0
    %289 = vdwg.mxu0
    %v290 = vstv %s67
    %v291 = vmul.f32 %v290, %v285
    %v292 = vld [vmem:[%s5] sm:$0x1]
    %v294 = vlaneseq
    %v295 = vshrl.u32 %v294, 7
    %v296 = vsub.s32 0, %v295
    %v297 = vrot.slane %v292, %v296
    %v299 = vadd.f32 %v291, %v297
    %300 = vst [vmem:[#allocation10] sm:$0xff] %v299
    // Predicated region
    $region34: #{tpu_custom_call.1} parent=1 // pred_check
      _
    $region35: #{tpu_custom_call.1} parent=1 // pred_check_branch
      %302 = sbr.rel (0) target = $region37
    $region36: #{tpu_custom_call.1} parent=1 // pred_region
      %s304 = ssub.s32 128, 128
      %305 = vsyncadd [#allocation6], %s304
      %s307 = sshll.u32 [#allocation10], 4
      %s308 = int_to_ptr.vmem [resolvable:$true] %s307
      %310 = dma.vmem_to_hbm [thread:$0]  %s308, 128, %s6, [#allocation6]
    $region37: #{tpu_custom_call.1} parent=1 // pred_fallthru
      _
    // Predicated region
    $region38: #{tpu_custom_call.1} parent=1 // pred_check
      _
    $region39: #{tpu_custom_call.1} parent=1 // pred_check_branch
      %312 = sbr.rel (0) target = $region41
    $region40: #{tpu_custom_call.1} parent=1 // pred_region
      %313 = dma.done [#allocation6], 128
    $region41: #{tpu_custom_call.1} parent=1 // pred_fallthru
      _
    %314 = vsyncpa [#allocation5], 1
    %315 = vsyncpa [#allocation8], 1
    %316 = vsyncpa [#allocation6], 1

</llo_original>
